<compile_context>
chip_gen: v5e
topology: v5e:2x2
jax: 0.10.0
libtpu: 0.0.40
codegen_flags: <defaults>
</compile_context>

<pallas_src>
import jax
import jax.numpy as jnp
from jax.experimental import pallas as pl
from jax.experimental.pallas import tpu as pltpu

LANE = 128
SUBLANE = 8


def _round_up(x, m):
    return ((x + m - 1) // m) * m


def actor_kernel(s_ref, w1_ref, b1_ref, w2_ref, b2_ref, w3_ref, b3_ref, o_ref):
    # Fully fused 3-layer MLP on one batch tile:
    #   3 MXU matmuls (bf16 operands, f32 accumulation) + VPU relu + EUP tanh,
    #   no HBM round-trips for intermediates.
    x = s_ref[...]                                                    # bf16 [TB, S]
    h1 = jnp.dot(x, w1_ref[...], preferred_element_type=jnp.float32) + b1_ref[...]
    h1 = jnp.maximum(h1, 0.0).astype(jnp.bfloat16)                    # [TB, 256]
    h2 = jnp.dot(h1, w2_ref[...], preferred_element_type=jnp.float32) + b2_ref[...]
    h2 = jnp.maximum(h2, 0.0).astype(jnp.bfloat16)                    # [TB, 256]
    h3 = jnp.dot(h2, w3_ref[...], preferred_element_type=jnp.float32) + b3_ref[...]
    o_ref[...] = jnp.tanh(h3).astype(o_ref.dtype)                     # [TB, Apad]


def prepare_actor_params(params):
    """One-time (per weight update) preprocessing, hoisted out of the forward path.

    Pads fc3 columns up to a multiple of 128 lanes (padded columns are exactly
    zero) and casts weights to bf16 / biases to f32 so the hot path does no
    standalone HBM-rewriting XLA ops on the weights.
    """
    w1, b1, w2, b2, w3, b3 = (params[k] for k in ("w1", "b1", "w2", "b2", "w3", "b3"))
    state_dim, hidden = w1.shape
    action_dim = w3.shape[1]
    # Keep act_pad at exactly the next multiple of 128; padding further would only
    # add output writeback for zero useful work.
    act_pad = _round_up(max(action_dim, LANE), LANE)
    w3p = jnp.zeros((hidden, act_pad), w3.dtype).at[:, :action_dim].set(w3)
    b3p = jnp.zeros((1, act_pad), b3.dtype).at[:, :action_dim].set(b3)
    return {
        "w1": w1.astype(jnp.bfloat16),
        "b1": b1.reshape(1, hidden).astype(jnp.float32),
        "w2": w2.astype(jnp.bfloat16),
        "b2": b2.reshape(1, hidden).astype(jnp.float32),
        "w3": w3p.astype(jnp.bfloat16),
        "b3": b3p.astype(jnp.float32),
        "state_dim": state_dim,
        "hidden": hidden,
        "action_dim": action_dim,
        "act_pad": act_pad,
    }


def _pick_batch_tile(batch, block_b):
    """Pick the batch tile TB and padded batch.

    - Tiles as large as possible (default block_b=512) to amortize the ~0.35 us
      per-grid-step pipeline overhead and fill the MXU's M dimension; never drops
      below ~block_b/2 for large batches.
    - Keeps >= 2 grid steps whenever the batch allows, so the "parallel" batch
      axis can be sharded across v7x's two TensorCores (no-op on v5e/v6e).
    """
    b_sub = _round_up(batch, SUBLANE)
    if b_sub <= SUBLANE:
        tb = b_sub                                    # too small to split
    elif b_sub <= 2 * block_b:
        tb = _round_up(-(-b_sub // 2), SUBLANE)       # exactly two tiles
    else:
        tb = block_b
    b_pad = _round_up(b_sub, tb)
    return tb, b_pad


def actor_forward(state, prepared, *, block_b=512, out_dtype=jnp.float32):
    """state: [B, state_dim] f32. prepared: output of prepare_actor_params().

    out_dtype=jnp.bfloat16 halves output writeback (useful on v6e at large batch,
    ~4e-3 abs error on tanh outputs); default f32 matches the PyTorch module.
    """
    B, state_dim = state.shape
    assert state_dim == prepared["state_dim"]
    hidden = prepared["hidden"]
    action_dim = prepared["action_dim"]
    act_pad = prepared["act_pad"]
    w1, b1 = prepared["w1"], prepared["b1"]
    w2, b2 = prepared["w2"], prepared["b2"]
    w3, b3 = prepared["w3"], prepared["b3"]

    tb, b_pad = _pick_batch_tile(B, block_b)

    # Hot-path input prep: bf16 cast (MXU operand) + batch pad only.
    state_bf = state.astype(jnp.bfloat16)
    if b_pad != B:
        state_bf = jnp.zeros((b_pad, state_dim), jnp.bfloat16).at[:B].set(state_bf)

    grid = (b_pad // tb,)

    flops = 2 * b_pad * (state_dim * hidden + hidden * hidden + hidden * act_pad)
    out_bytes = b_pad * act_pad * jnp.dtype(out_dtype).itemsize
    bytes_accessed = (
        state_bf.size * 2
        + (w1.size + w2.size + w3.size) * 2
        + (b1.size + b2.size + b3.size) * 4
        + out_bytes
    )
    cost = pl.CostEstimate(
        flops=flops, transcendentals=b_pad * act_pad, bytes_accessed=bytes_accessed)

    out = pl.pallas_call(
        actor_kernel,
        out_shape=jax.ShapeDtypeStruct((b_pad, act_pad), out_dtype),
        grid=grid,
        in_specs=[
            pl.BlockSpec((tb, state_dim), lambda i: (i, 0)),       # state batch tile
            # Constant-index specs: weights/biases stay VMEM-resident across steps.
            # Total resident footprint (~0.5 MB incl. double buffers) is nowhere near
            # any generation's VMEM limit, so no Buffered()/vmem tuning is needed.
            pl.BlockSpec((state_dim, hidden), lambda i: (0, 0)),   # w1
            pl.BlockSpec((1, hidden), lambda i: (0, 0)),           # b1
            pl.BlockSpec((hidden, hidden), lambda i: (0, 0)),      # w2
            pl.BlockSpec((1, hidden), lambda i: (0, 0)),           # b2
            pl.BlockSpec((hidden, act_pad), lambda i: (0, 0)),     # w3 (lane-padded)
            pl.BlockSpec((1, act_pad), lambda i: (0, 0)),          # b3 (lane-padded)
        ],
        out_specs=pl.BlockSpec((tb, act_pad), lambda i: (i, 0)),
        compiler_params=pltpu.CompilerParams(
            dimension_semantics=("parallel",)),   # megacore-shardable batch axis (v7x)
        cost_estimate=cost,
    )(state_bf, w1, b1, w2, b2, w3, b3)

    # Slice away batch padding and the zero-padded action lanes.
    return out[:B, :action_dim]


def init_actor_params(key, state_dim, action_dim, hidden=256):
    """Deterministic synthetic init (uniform, roughly matching nn.Linear scale)."""
    ks = jax.random.split(key, 6)

    def lin(kw, kb, fan_in, fan_out):
        bound = 1.0 / jnp.sqrt(fan_in)
        w = jax.random.uniform(kw, (fan_in, fan_out), jnp.float32, -bound, bound)
        b = jax.random.uniform(kb, (1, fan_out), jnp.float32, -bound, bound)
        return w, b

    w1, b1 = lin(ks[0], ks[1], state_dim, hidden)
    w2, b2 = lin(ks[2], ks[3], hidden, hidden)
    w3, b3 = lin(ks[4], ks[5], hidden, action_dim)
    return {"w1": w1, "b1": b1, "w2": w2, "b2": b2, "w3": w3, "b3": b3}


def actor_reference_f32(state, params):
    """Pure-JAX f32 reference matching the PyTorch forward exactly."""
    x = jnp.maximum(state @ params["w1"] + params["b1"], 0.0)
    x = jnp.maximum(x @ params["w2"] + params["b2"], 0.0)
    return jnp.tanh(x @ params["w3"] + params["b3"])


def actor_reference_bf16(state, params):
    """Pure-JAX reference mirroring the kernel's bf16-operand / f32-accumulate math."""
    def mm(a, w):
        return jnp.dot(a.astype(jnp.bfloat16), w.astype(jnp.bfloat16),
                       preferred_element_type=jnp.float32)
    x = jnp.maximum(mm(state, params["w1"]) + params["b1"], 0.0)
    x = jnp.maximum(mm(x, params["w2"]) + params["b2"], 0.0)
    return jnp.tanh(mm(x, params["w3"]) + params["b3"])


if __name__ == "__main__":
    key = jax.random.PRNGKey(0)
    k_state, k_state2, k_params = jax.random.split(key, 3)

    state_dim = 32
    action_dim = 8

    params = init_actor_params(k_params, state_dim, action_dim)
    prepared = prepare_actor_params(params)   # one-time weight pad/cast (hoisted)

    # Case 1: tiny RL-inference batch (single grid step).
    batch = 8
    state = jax.random.normal(k_state, (batch, state_dim), jnp.float32)
    out = jax.block_until_ready(actor_forward(state, prepared))
    assert out.shape == (batch, action_dim)
    assert jnp.allclose(out, actor_reference_bf16(state, params), atol=2e-3, rtol=2e-3)
    assert jnp.allclose(out, actor_reference_f32(state, params), atol=5e-2, rtol=5e-2)

    # Case 2: non-multiple batch -> exercises batch padding and the >=2-step grid
    # (v7x megacore path).
    batch2 = 24
    state2 = jax.random.normal(k_state2, (batch2, state_dim), jnp.float32)
    out2 = jax.block_until_ready(actor_forward(state2, prepared))
    assert out2.shape == (batch2, action_dim)
    assert jnp.allclose(out2, actor_reference_bf16(state2, params), atol=2e-3, rtol=2e-3)
    assert jnp.allclose(out2, actor_reference_f32(state2, params), atol=5e-2, rtol=5e-2)

    print("KERNEL_OK")
</pallas_src>

<mosaic_0001>
module attributes {stable_mosaic.version = 11 : i64} {
  func.func @actor_kernel(%arg0: i32, %arg1: memref<8x32xbf16, #tpu.memory_space<vmem>>, %arg2: memref<32x256xbf16, #tpu.memory_space<vmem>>, %arg3: memref<1x256xf32, #tpu.memory_space<vmem>>, %arg4: memref<256x256xbf16, #tpu.memory_space<vmem>>, %arg5: memref<1x256xf32, #tpu.memory_space<vmem>>, %arg6: memref<256x128xbf16, #tpu.memory_space<vmem>>, %arg7: memref<1x128xf32, #tpu.memory_space<vmem>>, %arg8: memref<8x128xf32, #tpu.memory_space<vmem>>) attributes {dimension_semantics = [#tpu.dimension_semantics<parallel>], iteration_bounds = array<i64: 1>, scalar_prefetch = 0 : i64, scratch_operands = 0 : i64, tpu.core_type = #tpu.core_type<tc>, window_params = [{transform_indices = @transform_0, window_bounds = array<i64: 8, 32>}, {pipeline_mode = #tpu.pipeline_mode<synchronous>, transform_indices = @transform_1, window_bounds = array<i64: 32, 256>}, {pipeline_mode = #tpu.pipeline_mode<synchronous>, transform_indices = @transform_2, window_bounds = array<i64: 1, 256>}, {pipeline_mode = #tpu.pipeline_mode<synchronous>, transform_indices = @transform_3, window_bounds = array<i64: 256, 256>}, {pipeline_mode = #tpu.pipeline_mode<synchronous>, transform_indices = @transform_4, window_bounds = array<i64: 1, 256>}, {pipeline_mode = #tpu.pipeline_mode<synchronous>, transform_indices = @transform_5, window_bounds = array<i64: 256, 128>}, {pipeline_mode = #tpu.pipeline_mode<synchronous>, transform_indices = @transform_6, window_bounds = array<i64: 1, 128>}, {transform_indices = @transform_7, window_bounds = array<i64: 8, 128>}]} {
    %c0 = arith.constant 0 : index
    %c0_0 = arith.constant 0 : index
    %0 = vector.load %arg1[%c0, %c0_0] : memref<8x32xbf16, #tpu.memory_space<vmem>>, vector<8x32xbf16>
    %c0_1 = arith.constant 0 : index
    %c0_2 = arith.constant 0 : index
    %1 = vector.load %arg2[%c0_1, %c0_2] : memref<32x256xbf16, #tpu.memory_space<vmem>>, vector<32x256xbf16>
    %cst = arith.constant dense<0.000000e+00> : vector<8x256xf32>
    %2 = tpu.matmul %0, %1, %cst {dimension_numbers = #tpu.dot_dimension_numbers<[1], [0], [0], [1], [0, 0, 1, 1], [], []>} : vector<8x32xbf16>, vector<32x256xbf16>, vector<8x256xf32> -> vector<8x256xf32>
    %c0_3 = arith.constant 0 : index
    %c0_4 = arith.constant 0 : index
    %3 = vector.load %arg3[%c0_3, %c0_4] : memref<1x256xf32, #tpu.memory_space<vmem>>, vector<1x256xf32>
    %4 = vector.broadcast %3 : vector<1x256xf32> to vector<8x256xf32>
    %5 = arith.addf %2, %4 : vector<8x256xf32>
    %cst_5 = arith.constant 0.000000e+00 : f32
    %6 = vector.broadcast %cst_5 : f32 to vector<8x256xf32>
    %7 = arith.maximumf %5, %6 : vector<8x256xf32>
    %8 = arith.truncf %7 : vector<8x256xf32> to vector<8x256xbf16>
    %c0_6 = arith.constant 0 : index
    %c0_7 = arith.constant 0 : index
    %9 = vector.load %arg4[%c0_6, %c0_7] : memref<256x256xbf16, #tpu.memory_space<vmem>>, vector<256x256xbf16>
    %cst_8 = arith.constant dense<0.000000e+00> : vector<8x256xf32>
    %10 = tpu.matmul %8, %9, %cst_8 {dimension_numbers = #tpu.dot_dimension_numbers<[1], [0], [0], [1], [0, 0, 1, 1], [], []>} : vector<8x256xbf16>, vector<256x256xbf16>, vector<8x256xf32> -> vector<8x256xf32>
    %c0_9 = arith.constant 0 : index
    %c0_10 = arith.constant 0 : index
    %11 = vector.load %arg5[%c0_9, %c0_10] : memref<1x256xf32, #tpu.memory_space<vmem>>, vector<1x256xf32>
    %12 = vector.broadcast %11 : vector<1x256xf32> to vector<8x256xf32>
    %13 = arith.addf %10, %12 : vector<8x256xf32>
    %cst_11 = arith.constant 0.000000e+00 : f32
    %14 = vector.broadcast %cst_11 : f32 to vector<8x256xf32>
    %15 = arith.maximumf %13, %14 : vector<8x256xf32>
    %16 = arith.truncf %15 : vector<8x256xf32> to vector<8x256xbf16>
    %c0_12 = arith.constant 0 : index
    %c0_13 = arith.constant 0 : index
    %17 = vector.load %arg6[%c0_12, %c0_13] : memref<256x128xbf16, #tpu.memory_space<vmem>>, vector<256x128xbf16>
    %cst_14 = arith.constant dense<0.000000e+00> : vector<8x128xf32>
    %18 = tpu.matmul %16, %17, %cst_14 {dimension_numbers = #tpu.dot_dimension_numbers<[1], [0], [0], [1], [0, 0, 1, 1], [], []>} : vector<8x256xbf16>, vector<256x128xbf16>, vector<8x128xf32> -> vector<8x128xf32>
    %c0_15 = arith.constant 0 : index
    %c0_16 = arith.constant 0 : index
    %19 = vector.load %arg7[%c0_15, %c0_16] : memref<1x128xf32, #tpu.memory_space<vmem>>, vector<1x128xf32>
    %20 = vector.broadcast %19 : vector<1x128xf32> to vector<8x128xf32>
    %21 = arith.addf %18, %20 : vector<8x128xf32>
    %22 = math.tanh %21 : vector<8x128xf32>
    %c0_17 = arith.constant 0 : index
    %c0_18 = arith.constant 0 : index
    %23 = vector.load %arg8[%c0_17, %c0_18] : memref<8x128xf32, #tpu.memory_space<vmem>>, vector<8x128xf32>
    tpu.vector_store %arg8[%c0_17, %c0_18], %22 {strides = array<i32>} : memref<8x128xf32, #tpu.memory_space<vmem>>, vector<8x128xf32>,
    return
  }
  func.func @transform_0(%arg0: i32) -> (i32, i32) {
    %c0_i32 = arith.constant 0 : i32
    %c0_i32_0 = arith.constant 0 : i32
    return %arg0, %c0_i32 : i32, i32
  }
  func.func @transform_1(%arg0: i32) -> (i32, i32) {
    %c0_i32 = arith.constant 0 : i32
    %c0_i32_0 = arith.constant 0 : i32
    %c0_i32_1 = arith.constant 0 : i32
    return %c0_i32, %c0_i32_0 : i32, i32
  }
  func.func @transform_2(%arg0: i32) -> (i32, i32) {
    %c0_i32 = arith.constant 0 : i32
    %c0_i32_0 = arith.constant 0 : i32
    %c0_i32_1 = arith.constant 0 : i32
    return %c0_i32, %c0_i32_0 : i32, i32
  }
  func.func @transform_3(%arg0: i32) -> (i32, i32) {
    %c0_i32 = arith.constant 0 : i32
    %c0_i32_0 = arith.constant 0 : i32
    %c0_i32_1 = arith.constant 0 : i32
    return %c0_i32, %c0_i32_0 : i32, i32
  }
  func.func @transform_4(%arg0: i32) -> (i32, i32) {
    %c0_i32 = arith.constant 0 : i32
    %c0_i32_0 = arith.constant 0 : i32
    %c0_i32_1 = arith.constant 0 : i32
    return %c0_i32, %c0_i32_0 : i32, i32
  }
  func.func @transform_5(%arg0: i32) -> (i32, i32) {
    %c0_i32 = arith.constant 0 : i32
    %c0_i32_0 = arith.constant 0 : i32
    %c0_i32_1 = arith.constant 0 : i32
    return %c0_i32, %c0_i32_0 : i32, i32
  }
  func.func @transform_6(%arg0: i32) -> (i32, i32) {
    %c0_i32 = arith.constant 0 : i32
    %c0_i32_0 = arith.constant 0 : i32
    %c0_i32_1 = arith.constant 0 : i32
    return %c0_i32, %c0_i32_0 : i32, i32
  }
  func.func @transform_7(%arg0: i32) -> (i32, i32) {
    %c0_i32 = arith.constant 0 : i32
    %c0_i32_0 = arith.constant 0 : i32
    return %arg0, %c0_i32 : i32, i32
  }
}

</mosaic_0001>

<llo_original>
// kernel: tpu_custom_call.1
$region0: #{tpu_custom_call.1}
  #allocation0 [shape = 'u32[]', space=smem, size = 0x4, offset = 0x4, fixed_abs, tag = 'smem constant byte address 0x4 - core index']
  #allocation1 [shape = 'u32[72,128]{1,0:T(1,128)}', space=vmem, size = 0x9000, scoped, tag = 'internal scratch']
  %s0 = inlined_call_operand.hbm [shape: bf16[8,32], index: 0, kind: input, shape index: {}]
  %s1 = inlined_call_operand.hbm [shape: bf16[32,256], index: 1, kind: input, shape index: {}]
  %s2 = inlined_call_operand.hbm [shape: f32[1,256], index: 2, kind: input, shape index: {}]
  %s3 = inlined_call_operand.hbm [shape: bf16[256,256], index: 3, kind: input, shape index: {}]
  %s4 = inlined_call_operand.vmem [shape: f32[1,256], index: 4, kind: input, shape index: {}]
  %s5 = inlined_call_operand.hbm [shape: bf16[256,128], index: 5, kind: input, shape index: {}]
  %s6 = inlined_call_operand.vmem [shape: f32[1,128], index: 6, kind: input, shape index: {}]
  %s7 = inlined_call_operand.hbm [shape: f32[8,128], index: 7, kind: output, shape index: {}]
  %s8 = sld [smem:[#allocation0]]
  $region58: #{tpu_custom_call.1} parent=0
    _
  %s10 = ssub.s32 1, %s8
  %s11 = scalar_select 0, %s10, %s8
  $region1: #{tpu_custom_call.1} parent=0
    #allocation2 [shape = 'u8[2048]{0}', space=vmem, size = 0x800, scoped, tag = 'input window, operand 0, single buffered']
    #allocation3 [shape = 's32[1]{0}', space=sflag, size = 0x4, scoped, tag = 'scoped memory for tpu_custom_call.1']
    #allocation4 [shape = 's32[1]{0}', space=sflag, size = 0x4, scoped, tag = 'scoped memory for tpu_custom_call.1']
    #allocation5 [shape = 'u8[16384]{0}', space=vmem, size = 0x4000, scoped, tag = 'input window, operand 1, single buffered']
    #allocation6 [shape = 's32[1]{0}', space=sflag, size = 0x4, scoped, tag = 'scoped memory for tpu_custom_call.1']
    #allocation7 [shape = 'u8[1024]{0}', space=vmem, size = 0x400, scoped, tag = 'input window, operand 2, single buffered']
    #allocation8 [shape = 'u8[131072]{0}', space=vmem, size = 0x20000, scoped, tag = 'input window, operand 3, single buffered']
    #allocation9 [shape = 's32[1]{0}', space=sflag, size = 0x4, scoped, tag = 'scoped memory for tpu_custom_call.1']
    #allocation10 [shape = 'u8[65536]{0}', space=vmem, size = 0x10000, scoped, tag = 'input window, operand 5, single buffered']
    #allocation11 [shape = 'u8[4096]{0}', space=vmem, size = 0x1000, scoped, tag = 'output window, operand 0, single buffered']
    %12 = vsyncpa [#allocation3], 0
    %13 = vsyncpa [#allocation6], 0
    %14 = vsyncpa [#allocation9], 0
    %15 = vsyncpa [#allocation4], 0
    // Predicated region
    $region2: #{tpu_custom_call.1} parent=1 // pred_check
      _
    $region3: #{tpu_custom_call.1} parent=1 // pred_check_branch
      %17 = sbr.rel (0) target = $region5
    $region4: #{tpu_custom_call.1} parent=1 // pred_region
      %19 = vsyncadd [#allocation3], 0
      %s21 = sshll.u32 %s0, 4
      %s22 = int_to_ptr.hbm [resolvable:$true] %s21
      %s23 = sshll.u32 [#allocation2], 4
      %s24 = int_to_ptr.vmem [resolvable:$true] %s23
      %26 = dma.hbm_to_vmem [thread:$0]  %s22, 64, %s24, [#allocation3]
    $region5: #{tpu_custom_call.1} parent=1 // pred_fallthru
      _
    // Predicated region
    $region6: #{tpu_custom_call.1} parent=1 // pred_check
      _
    $region7: #{tpu_custom_call.1} parent=1 // pred_check_branch
      %28 = sbr.rel (0) target = $region9
    $region8: #{tpu_custom_call.1} parent=1 // pred_region
      %30 = vsyncadd [#allocation6], 0
      %s31 = sshll.u32 %s1, 4
      %s32 = int_to_ptr.hbm [resolvable:$true] %s31
      %s33 = sshll.u32 [#allocation5], 4
      %s34 = int_to_ptr.vmem [resolvable:$true] %s33
      %39 = dma.hbm_to_vmem [thread:$0]  %s32, 512, %s34, [#allocation6], 128, 128, 8
    $region9: #{tpu_custom_call.1} parent=1 // pred_fallthru
      _
    // Predicated region
    $region10: #{tpu_custom_call.1} parent=1 // pred_check
      _
    $region11: #{tpu_custom_call.1} parent=1 // pred_check_branch
      %41 = sbr.rel (0) target = $region13
    $region12: #{tpu_custom_call.1} parent=1 // pred_region
      %43 = vsyncadd [#allocation6], 0
      %s45 = sshll.u32 %s2, 4
      %s46 = int_to_ptr.hbm [resolvable:$true] %s45
      %s47 = sshll.u32 [#allocation7], 4
      %s48 = int_to_ptr.vmem [resolvable:$true] %s47
      %50 = dma.hbm_to_vmem [thread:$0]  %s46, 32, %s48, [#allocation6]
    $region13: #{tpu_custom_call.1} parent=1 // pred_fallthru
      _
    // Predicated region
    $region14: #{tpu_custom_call.1} parent=1 // pred_check
      _
    $region15: #{tpu_custom_call.1} parent=1 // pred_check_branch
      %52 = sbr.rel (0) target = $region17
    $region16: #{tpu_custom_call.1} parent=1 // pred_region
      %54 = vsyncadd [#allocation9], 0
      %s55 = sshll.u32 %s3, 4
      %s56 = int_to_ptr.hbm [resolvable:$true] %s55
      %s57 = sshll.u32 [#allocation8], 4
      %s58 = int_to_ptr.vmem [resolvable:$true] %s57
      %63 = dma.hbm_to_vmem [thread:$0]  %s56, 4096, %s58, [#allocation9], 128, 128, 8
    $region17: #{tpu_custom_call.1} parent=1 // pred_fallthru
      _
    // Predicated region
    $region18: #{tpu_custom_call.1} parent=1 // pred_check
      _
    $region19: #{tpu_custom_call.1} parent=1 // pred_check_branch
      %65 = sbr.rel (0) target = $region21
    $region20: #{tpu_custom_call.1} parent=1 // pred_region
      _
    $region21: #{tpu_custom_call.1} parent=1 // pred_fallthru
      _
    // Predicated region
    $region22: #{tpu_custom_call.1} parent=1 // pred_check
      _
    $region23: #{tpu_custom_call.1} parent=1 // pred_check_branch
      %67 = sbr.rel (0) target = $region25
    $region24: #{tpu_custom_call.1} parent=1 // pred_region
      %69 = vsyncadd [#allocation9], 0
      %s70 = sshll.u32 %s5, 4
      %s71 = int_to_ptr.hbm [resolvable:$true] %s70
      %s72 = sshll.u32 [#allocation10], 4
      %s73 = int_to_ptr.vmem [resolvable:$true] %s72
      %78 = dma.hbm_to_vmem [thread:$0]  %s71, 2048, %s73, [#allocation9], 64, 64, 4
    $region25: #{tpu_custom_call.1} parent=1 // pred_fallthru
      _
    // Predicated region
    $region26: #{tpu_custom_call.1} parent=1 // pred_check
      _
    $region27: #{tpu_custom_call.1} parent=1 // pred_check_branch
      %80 = sbr.rel (0) target = $region29
    $region28: #{tpu_custom_call.1} parent=1 // pred_region
      _
    $region29: #{tpu_custom_call.1} parent=1 // pred_fallthru
      _
    // Predicated region
    $region30: #{tpu_custom_call.1} parent=1 // pred_check
      _
    $region31: #{tpu_custom_call.1} parent=1 // pred_check_branch
      %82 = sbr.rel (0) target = $region33
    $region32: #{tpu_custom_call.1} parent=1 // pred_region
      %84 = dma.done [#allocation3], 64
    $region33: #{tpu_custom_call.1} parent=1 // pred_fallthru
      _
    // Predicated region
    $region34: #{tpu_custom_call.1} parent=1 // pred_check
      _
    $region35: #{tpu_custom_call.1} parent=1 // pred_check_branch
      %86 = sbr.rel (0) target = $region37
    $region36: #{tpu_custom_call.1} parent=1 // pred_region
      %88 = dma.done [#allocation6], 512
    $region37: #{tpu_custom_call.1} parent=1 // pred_fallthru
      _
    // Predicated region
    $region38: #{tpu_custom_call.1} parent=1 // pred_check
      _
    $region39: #{tpu_custom_call.1} parent=1 // pred_check_branch
      %90 = sbr.rel (0) target = $region41
    $region40: #{tpu_custom_call.1} parent=1 // pred_region
      %92 = dma.done [#allocation6], 32
    $region41: #{tpu_custom_call.1} parent=1 // pred_fallthru
      _
    // Predicated region
    $region42: #{tpu_custom_call.1} parent=1 // pred_check
      _
    $region43: #{tpu_custom_call.1} parent=1 // pred_check_branch
      %94 = sbr.rel (0) target = $region45
    $region44: #{tpu_custom_call.1} parent=1 // pred_region
      %96 = dma.done [#allocation9], 4096
    $region45: #{tpu_custom_call.1} parent=1 // pred_fallthru
      _
    // Predicated region
    $region46: #{tpu_custom_call.1} parent=1 // pred_check
      _
    $region47: #{tpu_custom_call.1} parent=1 // pred_check_branch
      %98 = sbr.rel (0) target = $region49
    $region48: #{tpu_custom_call.1} parent=1 // pred_region
      %100 = dma.done [#allocation9], 2048
    $region49: #{tpu_custom_call.1} parent=1 // pred_fallthru
      _
    %v102 = vld [vmem:[#allocation2] sm:$0xf]
    %v103 = vld [vmem:[#allocation5] sm:$0xff]
    %v104 = vld [vmem:[#allocation5 + $0x8] sm:$0xff]
    %v105 = vld [vmem:[#allocation5 + $0x10] sm:$0xff]
    %v106 = vld [vmem:[#allocation5 + $0x18] sm:$0xff]
    %v107 = vld [vmem:[#allocation7] sm:$0x3]
    %v109 = vperm.slane %v107, 0
    %v110 = vperm.slane %v107, 1
    %v117 = vunpack.c.l.b16 %v103
    %v118 = vunpack.c.h.b16 %v103
    %v119 = vunpack.c.l.b16 %v104
    %v120 = vunpack.c.h.b16 %v104
    %v121 = vunpack.c.l.b16 %v105
    %v122 = vunpack.c.h.b16 %v105
    %v123 = vunpack.c.l.b16 %v106
    %v124 = vunpack.c.h.b16 %v106
    %v125 = vpack.c.b16 %v119, %v117
    %v126 = vpack.c.b16 %v120, %v118
    %v127 = vpack.c.b16 %v123, %v121
    %v128 = vpack.c.b16 %v124, %v122
    %vm133 = vcmask 261120
    %v135 = vsel %vm133, %v102, 0
    %137 = vmatpush.bf16.msra.mxu0 0
    %138 = vmatpush.bf16.msra.mxu0 0
    %139 = vmatpush.bf16.msra.mxu0 0
    %140 = vmatpush.bf16.msra.mxu0 0
    %141 = vmatpush.bf16.msra.mxu0 0
    %142 = vmatpush.bf16.msra.mxu0 0
    %143 = vmatpush.bf16.msra.mxu0 %v127
    %144 = vmatpush.bf16.msra.mxu0 %v125
    %145 = vmatmul.bf16.gmra.mxu0 %v135
    %v146 = vpop.f32.mrf.mxu0
    %v147 = vadd.f32 %v109, %v146
    %v148 = vpop.f32.mrf.mxu0
    %149 = vdwg.mxu0
    %150 = vmatpush.bf16.msra.mxu0 0
    %151 = vmatpush.bf16.msra.mxu0 0
    %152 = vmatpush.bf16.msra.mxu0 0
    %153 = vmatpush.bf16.msra.mxu0 0
    %154 = vmatpush.bf16.msra.mxu0 0
    %155 = vmatpush.bf16.msra.mxu0 0
    %156 = vmatpush.bf16.msra.mxu0 %v128
    %157 = vmatpush.bf16.msra.mxu0 %v126
    %158 = vmatmul.bf16.gmra.mxu0 %v135
    %v159 = vpop.f32.mrf.mxu0
    %v160 = vadd.f32 %v110, %v159
    %v161 = vpop.f32.mrf.mxu0
    %162 = vdwg.mxu0
    %v163 = vmax.f32 %v147, 0.0
    %v164 = vmax.f32 %v160, 0.0
    %v165 = vpack.c.bf16 %v163, %v163
    %v166 = vpack.c.bf16 %v164, %v164
    %v167 = vld [vmem:[#allocation8] sm:$0xff]
    %v168 = vld [vmem:[#allocation8 + $0x8] sm:$0xff]
    %v169 = vld [vmem:[#allocation8 + $0x10] sm:$0xff]
    %v170 = vld [vmem:[#allocation8 + $0x18] sm:$0xff]
    %v171 = vld [vmem:[#allocation8 + $0x20] sm:$0xff]
    %v172 = vld [vmem:[#allocation8 + $0x28] sm:$0xff]
    %v173 = vld [vmem:[#allocation8 + $0x30] sm:$0xff]
    %v174 = vld [vmem:[#allocation8 + $0x38] sm:$0xff]
    %v175 = vld [vmem:[#allocation8 + $0x40] sm:$0xff]
    %v176 = vld [vmem:[#allocation8 + $0x48] sm:$0xff]
    %v177 = vld [vmem:[#allocation8 + $0x50] sm:$0xff]
    %v178 = vld [vmem:[#allocation8 + $0x58] sm:$0xff]
    %v179 = vld [vmem:[#allocation8 + $0x60] sm:$0xff]
    %v180 = vld [vmem:[#allocation8 + $0x68] sm:$0xff]
    %v181 = vld [vmem:[#allocation8 + $0x70] sm:$0xff]
    %v182 = vld [vmem:[#allocation8 + $0x78] sm:$0xff]
    %v183 = vld [vmem:[#allocation8 + $0x80] sm:$0xff]
    %v184 = vld [vmem:[#allocation8 + $0x88] sm:$0xff]
    %v185 = vld [vmem:[#allocation8 + $0x90] sm:$0xff]
    %v186 = vld [vmem:[#allocation8 + $0x98] sm:$0xff]
    %v187 = vld [vmem:[#allocation8 + $0xa0] sm:$0xff]
    %v188 = vld [vmem:[#allocation8 + $0xa8] sm:$0xff]
    %v189 = vld [vmem:[#allocation8 + $0xb0] sm:$0xff]
    %v190 = vld [vmem:[#allocation8 + $0xb8] sm:$0xff]
    %v191 = vld [vmem:[#allocation8 + $0xc0] sm:$0xff]
    %v192 = vld [vmem:[#allocation8 + $0xc8] sm:$0xff]
    %v193 = vld [vmem:[#allocation8 + $0xd0] sm:$0xff]
    %v194 = vld [vmem:[#allocation8 + $0xd8] sm:$0xff]
    %v195 = vld [vmem:[#allocation8 + $0xe0] sm:$0xff]
    %v196 = vld [vmem:[#allocation8 + $0xe8] sm:$0xff]
    %v197 = vld [vmem:[#allocation8 + $0xf0] sm:$0xff]
    %v198 = vld [vmem:[#allocation8 + $0xf8] sm:$0xff]
    %v199 = vld [vmem:[%s4] sm:$0x3]
    %v201 = vperm.slane %v199, 0
    %v202 = vperm.slane %v199, 1
    %v237 = vunpack.c.l.b16 %v167
    %v238 = vunpack.c.h.b16 %v167
    %v239 = vunpack.c.l.b16 %v168
    %v240 = vunpack.c.h.b16 %v168
    %v241 = vunpack.c.l.b16 %v169
    %v242 = vunpack.c.h.b16 %v169
    %v243 = vunpack.c.l.b16 %v170
    %v244 = vunpack.c.h.b16 %v170
    %v245 = vunpack.c.l.b16 %v171
    %v246 = vunpack.c.h.b16 %v171
    %v247 = vunpack.c.l.b16 %v172
    %v248 = vunpack.c.h.b16 %v172
    %v249 = vunpack.c.l.b16 %v173
    %v250 = vunpack.c.h.b16 %v173
    %v251 = vunpack.c.l.b16 %v174
    %v252 = vunpack.c.h.b16 %v174
    %v253 = vunpack.c.l.b16 %v175
    %v254 = vunpack.c.h.b16 %v175
    %v255 = vunpack.c.l.b16 %v176
    %v256 = vunpack.c.h.b16 %v176
    %v257 = vunpack.c.l.b16 %v177
    %v258 = vunpack.c.h.b16 %v177
    %v259 = vunpack.c.l.b16 %v178
    %v260 = vunpack.c.h.b16 %v178
    %v261 = vunpack.c.l.b16 %v179
    %v262 = vunpack.c.h.b16 %v179
    %v263 = vunpack.c.l.b16 %v180
    %v264 = vunpack.c.h.b16 %v180
    %v265 = vunpack.c.l.b16 %v181
    %v266 = vunpack.c.h.b16 %v181
    %v267 = vunpack.c.l.b16 %v182
    %v268 = vunpack.c.h.b16 %v182
    %v269 = vunpack.c.l.b16 %v183
    %v270 = vunpack.c.h.b16 %v183
    %v271 = vunpack.c.l.b16 %v184
    %v272 = vunpack.c.h.b16 %v184
    %v273 = vunpack.c.l.b16 %v185
    %v274 = vunpack.c.h.b16 %v185
    %v275 = vunpack.c.l.b16 %v186
    %v276 = vunpack.c.h.b16 %v186
    %v277 = vunpack.c.l.b16 %v187
    %v278 = vunpack.c.h.b16 %v187
    %v279 = vunpack.c.l.b16 %v188
    %v280 = vunpack.c.h.b16 %v188
    %v281 = vunpack.c.l.b16 %v189
    %v282 = vunpack.c.h.b16 %v189
    %v283 = vunpack.c.l.b16 %v190
    %v284 = vunpack.c.h.b16 %v190
    %v285 = vunpack.c.l.b16 %v191
    %v286 = vunpack.c.h.b16 %v191
    %v287 = vunpack.c.l.b16 %v192
    %v288 = vunpack.c.h.b16 %v192
    %v289 = vunpack.c.l.b16 %v193
    %v290 = vunpack.c.h.b16 %v193
    %v291 = vunpack.c.l.b16 %v194
    %v292 = vunpack.c.h.b16 %v194
    %v293 = vunpack.c.l.b16 %v195
    %v294 = vunpack.c.h.b16 %v195
    %v295 = vunpack.c.l.b16 %v196
    %v296 = vunpack.c.h.b16 %v196
    %v297 = vunpack.c.l.b16 %v197
    %v298 = vunpack.c.h.b16 %v197
    %v299 = vunpack.c.l.b16 %v198
    %v300 = vunpack.c.h.b16 %v198
    %v301 = vpack.c.b16 %v239, %v237
    %v302 = vpack.c.b16 %v240, %v238
    %v303 = vpack.c.b16 %v243, %v241
    %v304 = vpack.c.b16 %v244, %v242
    %v305 = vpack.c.b16 %v247, %v245
    %v306 = vpack.c.b16 %v248, %v246
    %v307 = vpack.c.b16 %v251, %v249
    %v308 = vpack.c.b16 %v252, %v250
    %v309 = vpack.c.b16 %v255, %v253
    %v310 = vpack.c.b16 %v256, %v254
    %v311 = vpack.c.b16 %v259, %v257
    %v312 = vpack.c.b16 %v260, %v258
    %v313 = vpack.c.b16 %v263, %v261
    %v314 = vpack.c.b16 %v264, %v262
    %v315 = vpack.c.b16 %v267, %v265
    %v316 = vpack.c.b16 %v268, %v266
    %v317 = vpack.c.b16 %v271, %v269
    %v318 = vpack.c.b16 %v272, %v270
    %v319 = vpack.c.b16 %v275, %v273
    %v320 = vpack.c.b16 %v276, %v274
    %v321 = vpack.c.b16 %v279, %v277
    %v322 = vpack.c.b16 %v280, %v278
    %v323 = vpack.c.b16 %v283, %v281
    %v324 = vpack.c.b16 %v284, %v282
    %v325 = vpack.c.b16 %v287, %v285
    %v326 = vpack.c.b16 %v288, %v286
    %v327 = vpack.c.b16 %v291, %v289
    %v328 = vpack.c.b16 %v292, %v290
    %v329 = vpack.c.b16 %v295, %v293
    %v330 = vpack.c.b16 %v296, %v294
    %v331 = vpack.c.b16 %v299, %v297
    %v332 = vpack.c.b16 %v300, %v298
    %365 = vmatpush.bf16.msra.mxu0 %v315
    %366 = vmatpush.bf16.msra.mxu0 %v313
    %367 = vmatpush.bf16.msra.mxu0 %v311
    %368 = vmatpush.bf16.msra.mxu0 %v309
    %369 = vmatpush.bf16.msra.mxu0 %v307
    %370 = vmatpush.bf16.msra.mxu0 %v305
    %371 = vmatpush.bf16.msra.mxu0 %v303
    %372 = vmatpush.bf16.msra.mxu0 %v301
    %373 = vmatmul.bf16.gmra.mxu0 %v165
    %v374 = vpop.f32.mrf.mxu0
    %v375 = vadd.f32 %v201, %v374
    %v376 = vpop.f32.mrf.mxu0
    %377 = vdwg.mxu0
    %378 = vmatpush.bf16.msra.mxu0 %v331
    %379 = vmatpush.bf16.msra.mxu0 %v329
    %380 = vmatpush.bf16.msra.mxu0 %v327
    %381 = vmatpush.bf16.msra.mxu0 %v325
    %382 = vmatpush.bf16.msra.mxu0 %v323
    %383 = vmatpush.bf16.msra.mxu0 %v321
    %384 = vmatpush.bf16.msra.mxu0 %v319
    %385 = vmatpush.bf16.msra.mxu0 %v317
    %386 = vmatmul.bf16.gmra.mxu0 %v166
    %v387 = vpop.f32.mrf.mxu0
    %v388 = vadd.f32 %v375, %v387
    %v389 = vpop.f32.mrf.mxu0
    %390 = vdwg.mxu0
    %391 = vmatpush.bf16.msra.mxu0 %v316
    %392 = vmatpush.bf16.msra.mxu0 %v314
    %393 = vmatpush.bf16.msra.mxu0 %v312
    %394 = vmatpush.bf16.msra.mxu0 %v310
    %395 = vmatpush.bf16.msra.mxu0 %v308
    %396 = vmatpush.bf16.msra.mxu0 %v306
    %397 = vmatpush.bf16.msra.mxu0 %v304
    %398 = vmatpush.bf16.msra.mxu0 %v302
    %399 = vmatmul.bf16.gmra.mxu0 %v165
    %v400 = vpop.f32.mrf.mxu0
    %v401 = vadd.f32 %v202, %v400
    %v402 = vpop.f32.mrf.mxu0
    %403 = vdwg.mxu0
    %404 = vmatpush.bf16.msra.mxu0 %v332
    %405 = vmatpush.bf16.msra.mxu0 %v330
    %406 = vmatpush.bf16.msra.mxu0 %v328
    %407 = vmatpush.bf16.msra.mxu0 %v326
    %408 = vmatpush.bf16.msra.mxu0 %v324
    %409 = vmatpush.bf16.msra.mxu0 %v322
    %410 = vmatpush.bf16.msra.mxu0 %v320
    %411 = vmatpush.bf16.msra.mxu0 %v318
    %412 = vmatmul.bf16.gmra.mxu0 %v166
    %v413 = vpop.f32.mrf.mxu0
    %v414 = vadd.f32 %v401, %v413
    %v415 = vpop.f32.mrf.mxu0
    %416 = vdwg.mxu0
    %v417 = vmax.f32 %v388, 0.0
    %v418 = vmax.f32 %v414, 0.0
    %v419 = vpack.c.bf16 %v417, %v417
    %v420 = vpack.c.bf16 %v418, %v418
    %v421 = vld [vmem:[#allocation10] sm:$0xf]
    %v422 = vld [vmem:[#allocation10 + $0x4] sm:$0xf]
    %v423 = vld [vmem:[#allocation10 + $0x8] sm:$0xf]
    %v424 = vld [vmem:[#allocation10 + $0xc] sm:$0xf]
    %v425 = vld [vmem:[#allocation10 + $0x10] sm:$0xf]
    %v426 = vld [vmem:[#allocation10 + $0x14] sm:$0xf]
    %v427 = vld [vmem:[#allocation10 + $0x18] sm:$0xf]
    %v428 = vld [vmem:[#allocation10 + $0x1c] sm:$0xf]
    %v429 = vld [vmem:[#allocation10 + $0x20] sm:$0xf]
    %v430 = vld [vmem:[#allocation10 + $0x24] sm:$0xf]
    %v431 = vld [vmem:[#allocation10 + $0x28] sm:$0xf]
    %v432 = vld [vmem:[#allocation10 + $0x2c] sm:$0xf]
    %v433 = vld [vmem:[#allocation10 + $0x30] sm:$0xf]
    %v434 = vld [vmem:[#allocation10 + $0x34] sm:$0xf]
    %v435 = vld [vmem:[#allocation10 + $0x38] sm:$0xf]
    %v436 = vld [vmem:[#allocation10 + $0x3c] sm:$0xf]
    %v437 = vld [vmem:[#allocation10 + $0x40] sm:$0xf]
    %v438 = vld [vmem:[#allocation10 + $0x44] sm:$0xf]
    %v439 = vld [vmem:[#allocation10 + $0x48] sm:$0xf]
    %v440 = vld [vmem:[#allocation10 + $0x4c] sm:$0xf]
    %v441 = vld [vmem:[#allocation10 + $0x50] sm:$0xf]
    %v442 = vld [vmem:[#allocation10 + $0x54] sm:$0xf]
    %v443 = vld [vmem:[#allocation10 + $0x58] sm:$0xf]
    %v444 = vld [vmem:[#allocation10 + $0x5c] sm:$0xf]
    %v445 = vld [vmem:[#allocation10 + $0x60] sm:$0xf]
    %v446 = vld [vmem:[#allocation10 + $0x64] sm:$0xf]
    %v447 = vld [vmem:[#allocation10 + $0x68] sm:$0xf]
    %v448 = vld [vmem:[#allocation10 + $0x6c] sm:$0xf]
    %v449 = vld [vmem:[#allocation10 + $0x70] sm:$0xf]
    %v450 = vld [vmem:[#allocation10 + $0x74] sm:$0xf]
    %v451 = vld [vmem:[#allocation10 + $0x78] sm:$0xf]
    %v452 = vld [vmem:[#allocation10 + $0x7c] sm:$0xf]
    %v453 = vld [vmem:[%s6] sm:$0x1]
    %v455 = vperm.slane %v453, 0
    %v489 = vunpack.c.l.b16 %v421
    %v490 = vunpack.c.l.b16 %v422
    %v491 = vunpack.c.l.b16 %v423
    %v492 = vunpack.c.l.b16 %v424
    %v493 = vunpack.c.l.b16 %v425
    %v494 = vunpack.c.l.b16 %v426
    %v495 = vunpack.c.l.b16 %v427
    %v496 = vunpack.c.l.b16 %v428
    %v497 = vunpack.c.l.b16 %v429
    %v498 = vunpack.c.l.b16 %v430
    %v499 = vunpack.c.l.b16 %v431
    %v500 = vunpack.c.l.b16 %v432
    %v501 = vunpack.c.l.b16 %v433
    %v502 = vunpack.c.l.b16 %v434
    %v503 = vunpack.c.l.b16 %v435
    %v504 = vunpack.c.l.b16 %v436
    %v505 = vunpack.c.l.b16 %v437
    %v506 = vunpack.c.l.b16 %v438
    %v507 = vunpack.c.l.b16 %v439
    %v508 = vunpack.c.l.b16 %v440
    %v509 = vunpack.c.l.b16 %v441
    %v510 = vunpack.c.l.b16 %v442
    %v511 = vunpack.c.l.b16 %v443
    %v512 = vunpack.c.l.b16 %v444
    %v513 = vunpack.c.l.b16 %v445
    %v514 = vunpack.c.l.b16 %v446
    %v515 = vunpack.c.l.b16 %v447
    %v516 = vunpack.c.l.b16 %v448
    %v517 = vunpack.c.l.b16 %v449
    %v518 = vunpack.c.l.b16 %v450
    %v519 = vunpack.c.l.b16 %v451
    %v520 = vunpack.c.l.b16 %v452
    %v521 = vpack.c.b16 %v490, %v489
    %v522 = vpack.c.b16 %v492, %v491
    %v523 = vpack.c.b16 %v494, %v493
    %v524 = vpack.c.b16 %v496, %v495
    %v525 = vpack.c.b16 %v498, %v497
    %v526 = vpack.c.b16 %v500, %v499
    %v527 = vpack.c.b16 %v502, %v501
    %v528 = vpack.c.b16 %v504, %v503
    %v529 = vpack.c.b16 %v506, %v505
    %v530 = vpack.c.b16 %v508, %v507
    %v531 = vpack.c.b16 %v510, %v509
    %v532 = vpack.c.b16 %v512, %v511
    %v533 = vpack.c.b16 %v514, %v513
    %v534 = vpack.c.b16 %v516, %v515
    %v535 = vpack.c.b16 %v518, %v517
    %v536 = vpack.c.b16 %v520, %v519
    %553 = vmatpush.bf16.msra.mxu0 %v528
    %554 = vmatpush.bf16.msra.mxu0 %v527
    %555 = vmatpush.bf16.msra.mxu0 %v526
    %556 = vmatpush.bf16.msra.mxu0 %v525
    %557 = vmatpush.bf16.msra.mxu0 %v524
    %558 = vmatpush.bf16.msra.mxu0 %v523
    %559 = vmatpush.bf16.msra.mxu0 %v522
    %560 = vmatpush.bf16.msra.mxu0 %v521
    %561 = vmatmul.bf16.gmra.mxu0 %v419
    %v562 = vpop.f32.mrf.mxu0
    %v563 = vadd.f32 %v455, %v562
    %v564 = vpop.f32.mrf.mxu0
    %565 = vdwg.mxu0
    %566 = vmatpush.bf16.msra.mxu0 %v536
    %567 = vmatpush.bf16.msra.mxu0 %v535
    %568 = vmatpush.bf16.msra.mxu0 %v534
    %569 = vmatpush.bf16.msra.mxu0 %v533
    %570 = vmatpush.bf16.msra.mxu0 %v532
    %571 = vmatpush.bf16.msra.mxu0 %v531
    %572 = vmatpush.bf16.msra.mxu0 %v530
    %573 = vmatpush.bf16.msra.mxu0 %v529
    %574 = vmatmul.bf16.gmra.mxu0 %v420
    %v575 = vpop.f32.mrf.mxu0
    %v576 = vadd.f32 %v563, %v575
    %v577 = vpop.f32.mrf.mxu0
    %578 = vdwg.mxu0
    %v579 = vtanh.pop %v576
    %580 = vst [vmem:[#allocation11] sm:$0xff] %v579
    // Predicated region
    $region50: #{tpu_custom_call.1} parent=1 // pred_check
      _
    $region51: #{tpu_custom_call.1} parent=1 // pred_check_branch
      %582 = sbr.rel (0) target = $region53
    $region52: #{tpu_custom_call.1} parent=1 // pred_region
      %584 = vsyncadd [#allocation4], 0
      %s586 = sshll.u32 [#allocation11], 4
      %s587 = int_to_ptr.vmem [resolvable:$true] %s586
      %s588 = sshll.u32 %s7, 4
      %s589 = int_to_ptr.hbm [resolvable:$true] %s588
      %591 = dma.vmem_to_hbm [thread:$0]  %s587, 128, %s589, [#allocation4]
    $region53: #{tpu_custom_call.1} parent=1 // pred_fallthru
      _
    // Predicated region
    $region54: #{tpu_custom_call.1} parent=1 // pred_check
      _
    $region55: #{tpu_custom_call.1} parent=1 // pred_check_branch
      %593 = sbr.rel (0) target = $region57
    $region56: #{tpu_custom_call.1} parent=1 // pred_region
      %595 = dma.done [#allocation4], 128
    $region57: #{tpu_custom_call.1} parent=1 // pred_fallthru
      _
    %596 = vsyncpa [#allocation3], 1
    %597 = vsyncpa [#allocation6], 1
    %598 = vsyncpa [#allocation9], 1
    %599 = vsyncpa [#allocation4], 1

</llo_original>
